<compile_context>
chip_gen: v5e
topology: v5e:2x2
jax: 0.10.0
libtpu: 0.0.40
codegen_flags: <defaults>
</compile_context>

<pallas_src>
import functools

import jax
import jax.numpy as jnp
from jax.experimental import pallas as pl
from jax.experimental.pallas import tpu as pltpu

_LANE = 128
_NEG_SLOPE = 0.01
_BN_EPS = 1e-5
_MASK_VAL = -1e30  # finite "minus infinity" for padded logits


# ---------------------------------------------------------------------------
# Fused Pallas kernel: all blocks + head + log-softmax in one body
# ---------------------------------------------------------------------------
def _fused_kernel(n_blocks, valid_out, x_ref, *refs):
    """refs = [w0,b0,g0,be0, ..., w_{n-1},b_{n-1},g_{n-1},be_{n-1}, wH,bH, o_ref]."""
    o_ref = refs[-1]
    params = refs[:-1]

    y = x_ref[...]                                           # (B, P_in)  f32
    batch = y.shape[0]
    inv_b = jnp.float32(1.0 / float(batch))

    idx = 0
    for _ in range(n_blocks):
        w, b, gamma, beta = params[idx:idx + 4]
        idx += 4
        # Linear
        z = jnp.dot(y, w[...], preferred_element_type=jnp.float32) + b[...]
        # LeakyReLU (slope 0.01)
        z = jnp.where(z > 0, z, _NEG_SLOPE * z)
        # BatchNorm1d (training-mode batch stats), single-pass sum / sumsq
        s = jnp.sum(z, axis=0, keepdims=True)
        sq = jnp.sum(z * z, axis=0, keepdims=True)
        mean = s * inv_b
        var = jnp.maximum(sq * inv_b - mean * mean, 0.0)
        inv_std = jax.lax.rsqrt(var + _BN_EPS)
        scale = gamma[...] * inv_std                         # fused affine
        shift = beta[...] - mean * scale
        y = z * scale + shift

    # Head: Linear -> LogSoftmax over the valid (unpadded) columns only
    w, b = params[idx], params[idx + 1]
    logits = jnp.dot(y, w[...], preferred_element_type=jnp.float32) + b[...]
    col = jax.lax.broadcasted_iota(jnp.int32, logits.shape, 1)
    valid = col < valid_out
    logits = jnp.where(valid, logits, _MASK_VAL)
    m = jnp.max(logits, axis=-1, keepdims=True)
    zc = logits - m
    lse = jnp.log(jnp.sum(jnp.where(valid, jnp.exp(zc), 0.0), axis=-1, keepdims=True))
    o_ref[...] = zc - lse


def _vmem_spec():
    return pl.BlockSpec(memory_space=pltpu.MemorySpace.VMEM)


def build_forward(n_blocks, out_valid):
    """Returns a jitted forward(x_padded, *flat_padded_params) -> (B, out_valid)."""
    kernel = functools.partial(_fused_kernel, n_blocks, out_valid)

    @jax.jit
    def forward(x_pad, *flat_pad):
        batch = x_pad.shape[0]
        p_out = flat_pad[-1].shape[-1]          # padded head output width
        out = pl.pallas_call(
            kernel,
            out_shape=jax.ShapeDtypeStruct((batch, p_out), jnp.float32),
            in_specs=[_vmem_spec()] * (1 + len(flat_pad)),
            out_specs=_vmem_spec(),
            compiler_params=pltpu.CompilerParams(vmem_limit_bytes=32 << 20),
        )(x_pad, *flat_pad)
        return out[:, :out_valid]               # drop padded lanes

    return forward


# ---------------------------------------------------------------------------
# Parameter construction (PyTorch-default-like init), padding helpers
# ---------------------------------------------------------------------------
def init_params(key, input_size, output_size, hidden_sizes):
    """Weights stored transposed to (in, out); biases/gamma/beta as (1, out)."""
    params = []
    last = input_size
    sizes = list(hidden_sizes) + [output_size]
    for i, h in enumerate(sizes):
        key, kw, kb = jax.random.split(key, 3)
        bound = 1.0 / jnp.sqrt(jnp.float32(last))
        w = jax.random.uniform(kw, (last, h), jnp.float32, -bound, bound)
        b = jax.random.uniform(kb, (1, h), jnp.float32, -bound, bound)
        if i < len(hidden_sizes):
            gamma = jnp.ones((1, h), jnp.float32)    # BatchNorm1d weight
            beta = jnp.zeros((1, h), jnp.float32)    # BatchNorm1d bias
            params.append(("block", w, b, gamma, beta))
        else:
            params.append(("head", w, b))
        last = h
    return params


def _pad_axis(a, axis, mult=_LANE):
    size = a.shape[axis]
    target = ((size + mult - 1) // mult) * mult
    if target == size:
        return a
    pad = [(0, 0)] * a.ndim
    pad[axis] = (0, target - size)
    return jnp.pad(a, pad)


def pad_params(params):
    """Zero-pad every feature dim to a multiple of 128 (lane-dense).

    Zero padding is semantics-preserving: padded input columns contribute 0 to
    the matmul, padded output columns stay 0 through LeakyReLU and (since
    padded gamma/beta are 0) through the fused BatchNorm affine.
    """
    flat = []
    for p in params:
        if p[0] == "block":
            _, w, b, gamma, beta = p
            flat += [_pad_axis(_pad_axis(w, 0), 1), _pad_axis(b, 1),
                     _pad_axis(gamma, 1), _pad_axis(beta, 1)]
        else:
            _, w, b = p
            flat += [_pad_axis(_pad_axis(w, 0), 1), _pad_axis(b, 1)]
    return flat


# ---------------------------------------------------------------------------
# Pure-JAX reference (unpadded) for correctness checking
# ---------------------------------------------------------------------------
def reference_forward(x, params):
    y = x
    for p in params:
        if p[0] == "block":
            _, w, b, gamma, beta = p
            z = y @ w + b
            z = jnp.where(z > 0, z, _NEG_SLOPE * z)
            mean = jnp.mean(z, axis=0, keepdims=True)
            var = jnp.mean((z - mean) ** 2, axis=0, keepdims=True)
            y = (z - mean) * jax.lax.rsqrt(var + _BN_EPS) * gamma + beta
        else:
            _, w, b = p
            y = jax.nn.log_softmax(y @ w + b, axis=-1)
    return y


# ---------------------------------------------------------------------------
if __name__ == "__main__":
    # Small, module-consistent shapes: flattened 8x8 "image", 3 hidden layers.
    batch = 8                      # matches the 8-sublane tile
    input_size = 64
    hidden_sizes = [128, 96, 64]
    output_size = 10

    key = jax.random.PRNGKey(0)
    key, kx = jax.random.split(key)
    x = jax.random.normal(kx, (batch, input_size), jnp.float32)

    params = init_params(key, input_size, output_size, hidden_sizes)
    flat_padded = pad_params(params)
    x_padded = _pad_axis(x, 1)

    forward = build_forward(n_blocks=len(hidden_sizes), out_valid=output_size)
    out = forward(x_padded, *flat_padded)
    out = jax.block_until_ready(out)

    assert out.shape == (batch, output_size)
    # log-softmax rows should sum (in prob space) to ~1
    assert bool(jnp.all(jnp.abs(jnp.sum(jnp.exp(out), axis=-1) - 1.0) < 1e-4))
    # match the pure-JAX reference
    ref = reference_forward(x, params)
    assert bool(jnp.all(jnp.abs(out - ref) < 5e-4))
    print("KERNEL_OK")
</pallas_src>

<mosaic_0001>
module attributes {stable_mosaic.version = 11 : i64} {
  func.func @_fused_kernel(%arg0: memref<8x128xf32, #tpu.memory_space<vmem>>, %arg1: memref<128x128xf32, #tpu.memory_space<vmem>>, %arg2: memref<1x128xf32, #tpu.memory_space<vmem>>, %arg3: memref<1x128xf32, #tpu.memory_space<vmem>>, %arg4: memref<1x128xf32, #tpu.memory_space<vmem>>, %arg5: memref<128x128xf32, #tpu.memory_space<vmem>>, %arg6: memref<1x128xf32, #tpu.memory_space<vmem>>, %arg7: memref<1x128xf32, #tpu.memory_space<vmem>>, %arg8: memref<1x128xf32, #tpu.memory_space<vmem>>, %arg9: memref<128x128xf32, #tpu.memory_space<vmem>>, %arg10: memref<1x128xf32, #tpu.memory_space<vmem>>, %arg11: memref<1x128xf32, #tpu.memory_space<vmem>>, %arg12: memref<1x128xf32, #tpu.memory_space<vmem>>, %arg13: memref<128x128xf32, #tpu.memory_space<vmem>>, %arg14: memref<1x128xf32, #tpu.memory_space<vmem>>, %arg15: memref<8x128xf32, #tpu.memory_space<vmem>>) attributes {dimension_semantics = [], scalar_prefetch = 0 : i64, scratch_operands = 0 : i64, tpu.core_type = #tpu.core_type<tc>} {
    %c0 = arith.constant 0 : index
    %c0_0 = arith.constant 0 : index
    %0 = vector.load %arg0[%c0, %c0_0] : memref<8x128xf32, #tpu.memory_space<vmem>>, vector<8x128xf32>
    %c0_1 = arith.constant 0 : index
    %c0_2 = arith.constant 0 : index
    %1 = vector.load %arg1[%c0_1, %c0_2] : memref<128x128xf32, #tpu.memory_space<vmem>>, vector<128x128xf32>
    %cst = arith.constant dense<0.000000e+00> : vector<8x128xf32>
    %2 = tpu.matmul %0, %1, %cst {dimension_numbers = #tpu.dot_dimension_numbers<[1], [0], [0], [1], [0, 0, 1, 1], [], []>} : vector<8x128xf32>, vector<128x128xf32>, vector<8x128xf32> -> vector<8x128xf32>
    %c0_3 = arith.constant 0 : index
    %c0_4 = arith.constant 0 : index
    %3 = vector.load %arg2[%c0_3, %c0_4] : memref<1x128xf32, #tpu.memory_space<vmem>>, vector<1x128xf32>
    %4 = vector.broadcast %3 : vector<1x128xf32> to vector<8x128xf32>
    %5 = arith.addf %2, %4 : vector<8x128xf32>
    %cst_5 = arith.constant 0.000000e+00 : f32
    %6 = vector.broadcast %cst_5 : f32 to vector<8x128xf32>
    %7 = arith.cmpf ogt, %5, %6 : vector<8x128xf32>
    %cst_6 = arith.constant 0.00999999977 : f32
    %8 = vector.broadcast %cst_6 : f32 to vector<8x128xf32>
    %9 = arith.mulf %8, %5 : vector<8x128xf32>
    %10 = arith.select %7, %5, %9 : vector<8x128xi1>, vector<8x128xf32>
    %cst_7 = arith.constant dense<0.000000e+00> : vector<128xf32>
    %11 = vector.multi_reduction <add>, %10, %cst_7 [0] : vector<8x128xf32> to vector<128xf32>
    %12 = vector.shape_cast %11 : vector<128xf32> to vector<1x128xf32>
    %13 = arith.mulf %10, %10 : vector<8x128xf32>
    %cst_8 = arith.constant dense<0.000000e+00> : vector<128xf32>
    %14 = vector.multi_reduction <add>, %13, %cst_8 [0] : vector<8x128xf32> to vector<128xf32>
    %15 = vector.shape_cast %14 : vector<128xf32> to vector<1x128xf32>
    %cst_9 = arith.constant 1.250000e-01 : f32
    %16 = vector.broadcast %cst_9 : f32 to vector<1x128xf32>
    %17 = arith.mulf %12, %16 : vector<1x128xf32>
    %cst_10 = arith.constant 1.250000e-01 : f32
    %18 = vector.broadcast %cst_10 : f32 to vector<1x128xf32>
    %19 = arith.mulf %15, %18 : vector<1x128xf32>
    %20 = arith.mulf %17, %17 : vector<1x128xf32>
    %21 = arith.subf %19, %20 : vector<1x128xf32>
    %cst_11 = arith.constant 0.000000e+00 : f32
    %22 = vector.broadcast %cst_11 : f32 to vector<1x128xf32>
    %23 = arith.maximumf %21, %22 : vector<1x128xf32>
    %cst_12 = arith.constant 9.99999974E-6 : f32
    %24 = vector.broadcast %cst_12 : f32 to vector<1x128xf32>
    %25 = arith.addf %23, %24 : vector<1x128xf32>
    %26 = math.rsqrt %25 : vector<1x128xf32>
    %c0_13 = arith.constant 0 : index
    %c0_14 = arith.constant 0 : index
    %27 = vector.load %arg3[%c0_13, %c0_14] : memref<1x128xf32, #tpu.memory_space<vmem>>, vector<1x128xf32>
    %28 = arith.mulf %27, %26 : vector<1x128xf32>
    %c0_15 = arith.constant 0 : index
    %c0_16 = arith.constant 0 : index
    %29 = vector.load %arg4[%c0_15, %c0_16] : memref<1x128xf32, #tpu.memory_space<vmem>>, vector<1x128xf32>
    %30 = arith.mulf %17, %28 : vector<1x128xf32>
    %31 = arith.subf %29, %30 : vector<1x128xf32>
    %32 = vector.broadcast %28 : vector<1x128xf32> to vector<8x128xf32>
    %33 = arith.mulf %10, %32 : vector<8x128xf32>
    %34 = vector.broadcast %31 : vector<1x128xf32> to vector<8x128xf32>
    %35 = arith.addf %33, %34 : vector<8x128xf32>
    %c0_17 = arith.constant 0 : index
    %c0_18 = arith.constant 0 : index
    %36 = vector.load %arg5[%c0_17, %c0_18] : memref<128x128xf32, #tpu.memory_space<vmem>>, vector<128x128xf32>
    %cst_19 = arith.constant dense<0.000000e+00> : vector<8x128xf32>
    %37 = tpu.matmul %35, %36, %cst_19 {dimension_numbers = #tpu.dot_dimension_numbers<[1], [0], [0], [1], [0, 0, 1, 1], [], []>} : vector<8x128xf32>, vector<128x128xf32>, vector<8x128xf32> -> vector<8x128xf32>
    %c0_20 = arith.constant 0 : index
    %c0_21 = arith.constant 0 : index
    %38 = vector.load %arg6[%c0_20, %c0_21] : memref<1x128xf32, #tpu.memory_space<vmem>>, vector<1x128xf32>
    %39 = vector.broadcast %38 : vector<1x128xf32> to vector<8x128xf32>
    %40 = arith.addf %37, %39 : vector<8x128xf32>
    %cst_22 = arith.constant 0.000000e+00 : f32
    %41 = vector.broadcast %cst_22 : f32 to vector<8x128xf32>
    %42 = arith.cmpf ogt, %40, %41 : vector<8x128xf32>
    %cst_23 = arith.constant 0.00999999977 : f32
    %43 = vector.broadcast %cst_23 : f32 to vector<8x128xf32>
    %44 = arith.mulf %43, %40 : vector<8x128xf32>
    %45 = arith.select %42, %40, %44 : vector<8x128xi1>, vector<8x128xf32>
    %cst_24 = arith.constant dense<0.000000e+00> : vector<128xf32>
    %46 = vector.multi_reduction <add>, %45, %cst_24 [0] : vector<8x128xf32> to vector<128xf32>
    %47 = vector.shape_cast %46 : vector<128xf32> to vector<1x128xf32>
    %48 = arith.mulf %45, %45 : vector<8x128xf32>
    %cst_25 = arith.constant dense<0.000000e+00> : vector<128xf32>
    %49 = vector.multi_reduction <add>, %48, %cst_25 [0] : vector<8x128xf32> to vector<128xf32>
    %50 = vector.shape_cast %49 : vector<128xf32> to vector<1x128xf32>
    %cst_26 = arith.constant 1.250000e-01 : f32
    %51 = vector.broadcast %cst_26 : f32 to vector<1x128xf32>
    %52 = arith.mulf %47, %51 : vector<1x128xf32>
    %cst_27 = arith.constant 1.250000e-01 : f32
    %53 = vector.broadcast %cst_27 : f32 to vector<1x128xf32>
    %54 = arith.mulf %50, %53 : vector<1x128xf32>
    %55 = arith.mulf %52, %52 : vector<1x128xf32>
    %56 = arith.subf %54, %55 : vector<1x128xf32>
    %cst_28 = arith.constant 0.000000e+00 : f32
    %57 = vector.broadcast %cst_28 : f32 to vector<1x128xf32>
    %58 = arith.maximumf %56, %57 : vector<1x128xf32>
    %cst_29 = arith.constant 9.99999974E-6 : f32
    %59 = vector.broadcast %cst_29 : f32 to vector<1x128xf32>
    %60 = arith.addf %58, %59 : vector<1x128xf32>
    %61 = math.rsqrt %60 : vector<1x128xf32>
    %c0_30 = arith.constant 0 : index
    %c0_31 = arith.constant 0 : index
    %62 = vector.load %arg7[%c0_30, %c0_31] : memref<1x128xf32, #tpu.memory_space<vmem>>, vector<1x128xf32>
    %63 = arith.mulf %62, %61 : vector<1x128xf32>
    %c0_32 = arith.constant 0 : index
    %c0_33 = arith.constant 0 : index
    %64 = vector.load %arg8[%c0_32, %c0_33] : memref<1x128xf32, #tpu.memory_space<vmem>>, vector<1x128xf32>
    %65 = arith.mulf %52, %63 : vector<1x128xf32>
    %66 = arith.subf %64, %65 : vector<1x128xf32>
    %67 = vector.broadcast %63 : vector<1x128xf32> to vector<8x128xf32>
    %68 = arith.mulf %45, %67 : vector<8x128xf32>
    %69 = vector.broadcast %66 : vector<1x128xf32> to vector<8x128xf32>
    %70 = arith.addf %68, %69 : vector<8x128xf32>
    %c0_34 = arith.constant 0 : index
    %c0_35 = arith.constant 0 : index
    %71 = vector.load %arg9[%c0_34, %c0_35] : memref<128x128xf32, #tpu.memory_space<vmem>>, vector<128x128xf32>
    %cst_36 = arith.constant dense<0.000000e+00> : vector<8x128xf32>
    %72 = tpu.matmul %70, %71, %cst_36 {dimension_numbers = #tpu.dot_dimension_numbers<[1], [0], [0], [1], [0, 0, 1, 1], [], []>} : vector<8x128xf32>, vector<128x128xf32>, vector<8x128xf32> -> vector<8x128xf32>
    %c0_37 = arith.constant 0 : index
    %c0_38 = arith.constant 0 : index
    %73 = vector.load %arg10[%c0_37, %c0_38] : memref<1x128xf32, #tpu.memory_space<vmem>>, vector<1x128xf32>
    %74 = vector.broadcast %73 : vector<1x128xf32> to vector<8x128xf32>
    %75 = arith.addf %72, %74 : vector<8x128xf32>
    %cst_39 = arith.constant 0.000000e+00 : f32
    %76 = vector.broadcast %cst_39 : f32 to vector<8x128xf32>
    %77 = arith.cmpf ogt, %75, %76 : vector<8x128xf32>
    %cst_40 = arith.constant 0.00999999977 : f32
    %78 = vector.broadcast %cst_40 : f32 to vector<8x128xf32>
    %79 = arith.mulf %78, %75 : vector<8x128xf32>
    %80 = arith.select %77, %75, %79 : vector<8x128xi1>, vector<8x128xf32>
    %cst_41 = arith.constant dense<0.000000e+00> : vector<128xf32>
    %81 = vector.multi_reduction <add>, %80, %cst_41 [0] : vector<8x128xf32> to vector<128xf32>
    %82 = vector.shape_cast %81 : vector<128xf32> to vector<1x128xf32>
    %83 = arith.mulf %80, %80 : vector<8x128xf32>
    %cst_42 = arith.constant dense<0.000000e+00> : vector<128xf32>
    %84 = vector.multi_reduction <add>, %83, %cst_42 [0] : vector<8x128xf32> to vector<128xf32>
    %85 = vector.shape_cast %84 : vector<128xf32> to vector<1x128xf32>
    %cst_43 = arith.constant 1.250000e-01 : f32
    %86 = vector.broadcast %cst_43 : f32 to vector<1x128xf32>
    %87 = arith.mulf %82, %86 : vector<1x128xf32>
    %cst_44 = arith.constant 1.250000e-01 : f32
    %88 = vector.broadcast %cst_44 : f32 to vector<1x128xf32>
    %89 = arith.mulf %85, %88 : vector<1x128xf32>
    %90 = arith.mulf %87, %87 : vector<1x128xf32>
    %91 = arith.subf %89, %90 : vector<1x128xf32>
    %cst_45 = arith.constant 0.000000e+00 : f32
    %92 = vector.broadcast %cst_45 : f32 to vector<1x128xf32>
    %93 = arith.maximumf %91, %92 : vector<1x128xf32>
    %cst_46 = arith.constant 9.99999974E-6 : f32
    %94 = vector.broadcast %cst_46 : f32 to vector<1x128xf32>
    %95 = arith.addf %93, %94 : vector<1x128xf32>
    %96 = math.rsqrt %95 : vector<1x128xf32>
    %c0_47 = arith.constant 0 : index
    %c0_48 = arith.constant 0 : index
    %97 = vector.load %arg11[%c0_47, %c0_48] : memref<1x128xf32, #tpu.memory_space<vmem>>, vector<1x128xf32>
    %98 = arith.mulf %97, %96 : vector<1x128xf32>
    %c0_49 = arith.constant 0 : index
    %c0_50 = arith.constant 0 : index
    %99 = vector.load %arg12[%c0_49, %c0_50] : memref<1x128xf32, #tpu.memory_space<vmem>>, vector<1x128xf32>
    %100 = arith.mulf %87, %98 : vector<1x128xf32>
    %101 = arith.subf %99, %100 : vector<1x128xf32>
    %102 = vector.broadcast %98 : vector<1x128xf32> to vector<8x128xf32>
    %103 = arith.mulf %80, %102 : vector<8x128xf32>
    %104 = vector.broadcast %101 : vector<1x128xf32> to vector<8x128xf32>
    %105 = arith.addf %103, %104 : vector<8x128xf32>
    %c0_51 = arith.constant 0 : index
    %c0_52 = arith.constant 0 : index
    %106 = vector.load %arg13[%c0_51, %c0_52] : memref<128x128xf32, #tpu.memory_space<vmem>>, vector<128x128xf32>
    %cst_53 = arith.constant dense<0.000000e+00> : vector<8x128xf32>
    %107 = tpu.matmul %105, %106, %cst_53 {dimension_numbers = #tpu.dot_dimension_numbers<[1], [0], [0], [1], [0, 0, 1, 1], [], []>} : vector<8x128xf32>, vector<128x128xf32>, vector<8x128xf32> -> vector<8x128xf32>
    %c0_54 = arith.constant 0 : index
    %c0_55 = arith.constant 0 : index
    %108 = vector.load %arg14[%c0_54, %c0_55] : memref<1x128xf32, #tpu.memory_space<vmem>>, vector<1x128xf32>
    %109 = vector.broadcast %108 : vector<1x128xf32> to vector<8x128xf32>
    %110 = arith.addf %107, %109 : vector<8x128xf32>
    %111 = tpu.iota {dimensions = array<i32: 1>} : vector<8x128xi32>
    %c10_i32 = arith.constant 10 : i32
    %112 = vector.broadcast %c10_i32 : i32 to vector<8x128xi32>
    %113 = arith.cmpi slt, %111, %112 : vector<8x128xi32>
    %cst_56 = arith.constant -1.000000e+30 : f32
    %114 = vector.broadcast %cst_56 : f32 to vector<8x128xf32>
    %115 = arith.select %113, %110, %114 : vector<8x128xi1>, vector<8x128xf32>
    %cst_57 = arith.constant dense<0xFF800000> : vector<8xf32>
    %116 = vector.multi_reduction <maximumf>, %115, %cst_57 [1] : vector<8x128xf32> to vector<8xf32>
    %117 = vector.shape_cast %116 : vector<8xf32> to vector<8x1xf32>
    %118 = vector.broadcast %117 : vector<8x1xf32> to vector<8x128xf32>
    %119 = arith.subf %115, %118 : vector<8x128xf32>
    %120 = math.exp %119 : vector<8x128xf32>
    %cst_58 = arith.constant 0.000000e+00 : f32
    %121 = vector.broadcast %cst_58 : f32 to vector<8x128xf32>
    %122 = arith.select %113, %120, %121 : vector<8x128xi1>, vector<8x128xf32>
    %cst_59 = arith.constant dense<0.000000e+00> : vector<8xf32>
    %123 = vector.multi_reduction <add>, %122, %cst_59 [1] : vector<8x128xf32> to vector<8xf32>
    %124 = vector.shape_cast %123 : vector<8xf32> to vector<8x1xf32>
    %125 = math.log %124 : vector<8x1xf32>
    %126 = vector.broadcast %125 : vector<8x1xf32> to vector<8x128xf32>
    %127 = arith.subf %119, %126 : vector<8x128xf32>
    %c0_60 = arith.constant 0 : index
    %c0_61 = arith.constant 0 : index
    %128 = vector.load %arg15[%c0_60, %c0_61] : memref<8x128xf32, #tpu.memory_space<vmem>>, vector<8x128xf32>
    tpu.vector_store %arg15[%c0_60, %c0_61], %127 {strides = array<i32>} : memref<8x128xf32, #tpu.memory_space<vmem>>, vector<8x128xf32>,
    return
  }
}

</mosaic_0001>

<llo_original>
// kernel: forward.1
$region0: #{forward.1}
  #allocation0 [shape = 'u32[]', space=smem, size = 0x4, offset = 0x4, fixed_abs, tag = 'smem constant byte address 0x4 - core index']
  #allocation1 [shape = 'u32[72,128]{1,0:T(1,128)}', space=vmem, size = 0x9000, scoped, tag = 'internal scratch']
  %s0 = inlined_call_operand.hbm [shape: f32[8,128], index: 0, kind: input, shape index: {}]
  %s1 = inlined_call_operand.hbm [shape: f32[128,128], index: 1, kind: input, shape index: {}]
  %s2 = inlined_call_operand.vmem [shape: f32[1,128], index: 2, kind: input, shape index: {}]
  %s3 = inlined_call_operand.vmem [shape: f32[1,128], index: 3, kind: input, shape index: {}]
  %s4 = inlined_call_operand.vmem [shape: f32[1,128], index: 4, kind: input, shape index: {}]
  %s5 = inlined_call_operand.hbm [shape: f32[128,128], index: 5, kind: input, shape index: {}]
  %s6 = inlined_call_operand.vmem [shape: f32[1,128], index: 6, kind: input, shape index: {}]
  %s7 = inlined_call_operand.vmem [shape: f32[1,128], index: 7, kind: input, shape index: {}]
  %s8 = inlined_call_operand.vmem [shape: f32[1,128], index: 8, kind: input, shape index: {}]
  %s9 = inlined_call_operand.hbm [shape: f32[128,128], index: 9, kind: input, shape index: {}]
  %s10 = inlined_call_operand.vmem [shape: f32[1,128], index: 10, kind: input, shape index: {}]
  %s11 = inlined_call_operand.vmem [shape: f32[1,128], index: 11, kind: input, shape index: {}]
  %s12 = inlined_call_operand.vmem [shape: f32[1,128], index: 12, kind: input, shape index: {}]
  %s13 = inlined_call_operand.hbm [shape: f32[128,128], index: 13, kind: input, shape index: {}]
  %s14 = inlined_call_operand.vmem [shape: f32[1,128], index: 14, kind: input, shape index: {}]
  %s15 = inlined_call_operand.hbm [shape: f32[8,128], index: 15, kind: output, shape index: {}]
  %s16 = sld [smem:[#allocation0]]
  $region90: #{forward.1} parent=0
    _
  %s18 = ssub.s32 1, %s16
  %s19 = scalar_select 0, %s18, %s16
  $region1: #{forward.1} parent=0
    #allocation2 [shape = 'u8[4096]{0}', space=vmem, size = 0x1000, scoped, tag = 'input window, operand 0, single buffered']
    #allocation3 [shape = 's32[1]{0}', space=sflag, size = 0x4, scoped, tag = 'scoped memory for forward.1']
    #allocation4 [shape = 's32[1]{0}', space=sflag, size = 0x4, scoped, tag = 'scoped memory for forward.1']
    #allocation5 [shape = 'u8[65536]{0}', space=vmem, size = 0x10000, scoped, tag = 'input window, operand 1, single buffered']
    #allocation6 [shape = 's32[1]{0}', space=sflag, size = 0x4, scoped, tag = 'scoped memory for forward.1']
    #allocation7 [shape = 'u8[65536]{0}', space=vmem, size = 0x10000, scoped, tag = 'input window, operand 5, single buffered']
    #allocation8 [shape = 'u8[65536]{0}', space=vmem, size = 0x10000, scoped, tag = 'input window, operand 9, single buffered']
    #allocation9 [shape = 's32[1]{0}', space=sflag, size = 0x4, scoped, tag = 'scoped memory for forward.1']
    #allocation10 [shape = 'u8[65536]{0}', space=vmem, size = 0x10000, scoped, tag = 'input window, operand 13, single buffered']
    #allocation11 [shape = 'u8[4096]{0}', space=vmem, size = 0x1000, scoped, tag = 'output window, operand 0, single buffered']
    %20 = vsyncpa [#allocation3], 0
    %21 = vsyncpa [#allocation6], 0
    %22 = vsyncpa [#allocation9], 0
    %23 = vsyncpa [#allocation4], 0
    // Predicated region
    $region2: #{forward.1} parent=1 // pred_check
      _
    $region3: #{forward.1} parent=1 // pred_check_branch
      %25 = sbr.rel (0) target = $region5
    $region4: #{forward.1} parent=1 // pred_region
      %27 = vsyncadd [#allocation3], 0
      %s29 = sshll.u32 %s0, 4
      %s30 = int_to_ptr.hbm [resolvable:$true] %s29
      %s31 = sshll.u32 [#allocation2], 4
      %s32 = int_to_ptr.vmem [resolvable:$true] %s31
      %34 = dma.hbm_to_vmem [thread:$0]  %s30, 128, %s32, [#allocation3]
    $region5: #{forward.1} parent=1 // pred_fallthru
      _
    // Predicated region
    $region6: #{forward.1} parent=1 // pred_check
      _
    $region7: #{forward.1} parent=1 // pred_check_branch
      %36 = sbr.rel (0) target = $region9
    $region8: #{forward.1} parent=1 // pred_region
      %38 = vsyncadd [#allocation6], 0
      %s39 = sshll.u32 %s1, 4
      %s40 = int_to_ptr.hbm [resolvable:$true] %s39
      %s41 = sshll.u32 [#allocation5], 4
      %s42 = int_to_ptr.vmem [resolvable:$true] %s41
      %47 = dma.hbm_to_vmem [thread:$0]  %s40, 2048, %s42, [#allocation6], 128, 128, 8
    $region9: #{forward.1} parent=1 // pred_fallthru
      _
    // Predicated region
    $region10: #{forward.1} parent=1 // pred_check
      _
    $region11: #{forward.1} parent=1 // pred_check_branch
      %49 = sbr.rel (0) target = $region13
    $region12: #{forward.1} parent=1 // pred_region
      _
    $region13: #{forward.1} parent=1 // pred_fallthru
      _
    // Predicated region
    $region14: #{forward.1} parent=1 // pred_check
      _
    $region15: #{forward.1} parent=1 // pred_check_branch
      %51 = sbr.rel (0) target = $region17
    $region16: #{forward.1} parent=1 // pred_region
      _
    $region17: #{forward.1} parent=1 // pred_fallthru
      _
    // Predicated region
    $region18: #{forward.1} parent=1 // pred_check
      _
    $region19: #{forward.1} parent=1 // pred_check_branch
      %53 = sbr.rel (0) target = $region21
    $region20: #{forward.1} parent=1 // pred_region
      _
    $region21: #{forward.1} parent=1 // pred_fallthru
      _
    // Predicated region
    $region22: #{forward.1} parent=1 // pred_check
      _
    $region23: #{forward.1} parent=1 // pred_check_branch
      %55 = sbr.rel (0) target = $region25
    $region24: #{forward.1} parent=1 // pred_region
      %57 = vsyncadd [#allocation6], 0
      %s58 = sshll.u32 %s5, 4
      %s59 = int_to_ptr.hbm [resolvable:$true] %s58
      %s60 = sshll.u32 [#allocation7], 4
      %s61 = int_to_ptr.vmem [resolvable:$true] %s60
      %66 = dma.hbm_to_vmem [thread:$0]  %s59, 2048, %s61, [#allocation6], 128, 128, 8
    $region25: #{forward.1} parent=1 // pred_fallthru
      _
    // Predicated region
    $region26: #{forward.1} parent=1 // pred_check
      _
    $region27: #{forward.1} parent=1 // pred_check_branch
      %68 = sbr.rel (0) target = $region29
    $region28: #{forward.1} parent=1 // pred_region
      _
    $region29: #{forward.1} parent=1 // pred_fallthru
      _
    // Predicated region
    $region30: #{forward.1} parent=1 // pred_check
      _
    $region31: #{forward.1} parent=1 // pred_check_branch
      %70 = sbr.rel (0) target = $region33
    $region32: #{forward.1} parent=1 // pred_region
      _
    $region33: #{forward.1} parent=1 // pred_fallthru
      _
    // Predicated region
    $region34: #{forward.1} parent=1 // pred_check
      _
    $region35: #{forward.1} parent=1 // pred_check_branch
      %72 = sbr.rel (0) target = $region37
    $region36: #{forward.1} parent=1 // pred_region
      _
    $region37: #{forward.1} parent=1 // pred_fallthru
      _
    // Predicated region
    $region38: #{forward.1} parent=1 // pred_check
      _
    $region39: #{forward.1} parent=1 // pred_check_branch
      %74 = sbr.rel (0) target = $region41
    $region40: #{forward.1} parent=1 // pred_region
      %76 = vsyncadd [#allocation9], 0
      %s77 = sshll.u32 %s9, 4
      %s78 = int_to_ptr.hbm [resolvable:$true] %s77
      %s79 = sshll.u32 [#allocation8], 4
      %s80 = int_to_ptr.vmem [resolvable:$true] %s79
      %85 = dma.hbm_to_vmem [thread:$0]  %s78, 2048, %s80, [#allocation9], 128, 128, 8
    $region41: #{forward.1} parent=1 // pred_fallthru
      _
    // Predicated region
    $region42: #{forward.1} parent=1 // pred_check
      _
    $region43: #{forward.1} parent=1 // pred_check_branch
      %87 = sbr.rel (0) target = $region45
    $region44: #{forward.1} parent=1 // pred_region
      _
    $region45: #{forward.1} parent=1 // pred_fallthru
      _
    // Predicated region
    $region46: #{forward.1} parent=1 // pred_check
      _
    $region47: #{forward.1} parent=1 // pred_check_branch
      %89 = sbr.rel (0) target = $region49
    $region48: #{forward.1} parent=1 // pred_region
      _
    $region49: #{forward.1} parent=1 // pred_fallthru
      _
    // Predicated region
    $region50: #{forward.1} parent=1 // pred_check
      _
    $region51: #{forward.1} parent=1 // pred_check_branch
      %91 = sbr.rel (0) target = $region53
    $region52: #{forward.1} parent=1 // pred_region
      _
    $region53: #{forward.1} parent=1 // pred_fallthru
      _
    // Predicated region
    $region54: #{forward.1} parent=1 // pred_check
      _
    $region55: #{forward.1} parent=1 // pred_check_branch
      %93 = sbr.rel (0) target = $region57
    $region56: #{forward.1} parent=1 // pred_region
      %95 = vsyncadd [#allocation9], 0
      %s96 = sshll.u32 %s13, 4
      %s97 = int_to_ptr.hbm [resolvable:$true] %s96
      %s98 = sshll.u32 [#allocation10], 4
      %s99 = int_to_ptr.vmem [resolvable:$true] %s98
      %104 = dma.hbm_to_vmem [thread:$0]  %s97, 2048, %s99, [#allocation9], 128, 128, 8
    $region57: #{forward.1} parent=1 // pred_fallthru
      _
    // Predicated region
    $region58: #{forward.1} parent=1 // pred_check
      _
    $region59: #{forward.1} parent=1 // pred_check_branch
      %106 = sbr.rel (0) target = $region61
    $region60: #{forward.1} parent=1 // pred_region
      _
    $region61: #{forward.1} parent=1 // pred_fallthru
      _
    // Predicated region
    $region62: #{forward.1} parent=1 // pred_check
      _
    $region63: #{forward.1} parent=1 // pred_check_branch
      %108 = sbr.rel (0) target = $region65
    $region64: #{forward.1} parent=1 // pred_region
      %110 = dma.done [#allocation3], 128
    $region65: #{forward.1} parent=1 // pred_fallthru
      _
    // Predicated region
    $region66: #{forward.1} parent=1 // pred_check
      _
    $region67: #{forward.1} parent=1 // pred_check_branch
      %112 = sbr.rel (0) target = $region69
    $region68: #{forward.1} parent=1 // pred_region
      %114 = dma.done [#allocation6], 2048
    $region69: #{forward.1} parent=1 // pred_fallthru
      _
    // Predicated region
    $region70: #{forward.1} parent=1 // pred_check
      _
    $region71: #{forward.1} parent=1 // pred_check_branch
      %116 = sbr.rel (0) target = $region73
    $region72: #{forward.1} parent=1 // pred_region
      %118 = dma.done [#allocation6], 2048
    $region73: #{forward.1} parent=1 // pred_fallthru
      _
    // Predicated region
    $region74: #{forward.1} parent=1 // pred_check
      _
    $region75: #{forward.1} parent=1 // pred_check_branch
      %120 = sbr.rel (0) target = $region77
    $region76: #{forward.1} parent=1 // pred_region
      %122 = dma.done [#allocation9], 2048
    $region77: #{forward.1} parent=1 // pred_fallthru
      _
    // Predicated region
    $region78: #{forward.1} parent=1 // pred_check
      _
    $region79: #{forward.1} parent=1 // pred_check_branch
      %124 = sbr.rel (0) target = $region81
    $region80: #{forward.1} parent=1 // pred_region
      %126 = dma.done [#allocation9], 2048
    $region81: #{forward.1} parent=1 // pred_fallthru
      _
    %v127 = vld [vmem:[#allocation2] sm:$0xff]
    %v128 = vld [vmem:[#allocation5] sm:$0xff]
    %v129 = vld [vmem:[#allocation5 + $0x8] sm:$0xff]
    %v130 = vld [vmem:[#allocation5 + $0x10] sm:$0xff]
    %v131 = vld [vmem:[#allocation5 + $0x18] sm:$0xff]
    %v132 = vld [vmem:[#allocation5 + $0x20] sm:$0xff]
    %v133 = vld [vmem:[#allocation5 + $0x28] sm:$0xff]
    %v134 = vld [vmem:[#allocation5 + $0x30] sm:$0xff]
    %v135 = vld [vmem:[#allocation5 + $0x38] sm:$0xff]
    %v136 = vld [vmem:[#allocation5 + $0x40] sm:$0xff]
    %v137 = vld [vmem:[#allocation5 + $0x48] sm:$0xff]
    %v138 = vld [vmem:[#allocation5 + $0x50] sm:$0xff]
    %v139 = vld [vmem:[#allocation5 + $0x58] sm:$0xff]
    %v140 = vld [vmem:[#allocation5 + $0x60] sm:$0xff]
    %v141 = vld [vmem:[#allocation5 + $0x68] sm:$0xff]
    %v142 = vld [vmem:[#allocation5 + $0x70] sm:$0xff]
    %v143 = vld [vmem:[#allocation5 + $0x78] sm:$0xff]
    %v144 = vld [vmem:[%s2] sm:$0x1]
    %v146 = vperm.slane %v144, 0
    %148 = vmatpush.msra.mxu0 %v143
    %149 = vmatpush.msra.mxu0 %v142
    %150 = vmatpush.msra.mxu0 %v141
    %151 = vmatpush.msra.mxu0 %v140
    %152 = vmatpush.msra.mxu0 %v139
    %153 = vmatpush.msra.mxu0 %v138
    %154 = vmatpush.msra.mxu0 %v137
    %155 = vmatpush.msra.mxu0 %v136
    %156 = vmatpush.msra.mxu0 %v135
    %157 = vmatpush.msra.mxu0 %v134
    %158 = vmatpush.msra.mxu0 %v133
    %159 = vmatpush.msra.mxu0 %v132
    %160 = vmatpush.msra.mxu0 %v131
    %161 = vmatpush.msra.mxu0 %v130
    %162 = vmatpush.msra.mxu0 %v129
    %163 = vmatpush.msra.mxu0 %v128
    %164 = vmatmul.f32.gmra.mxu0 %v127
    %v165 = vpop.f32.mrf.mxu0
    %v166 = vadd.f32 %v146, %v165
    %167 = vdwg.mxu0
    %vm168 = vcmp.gt.f32.partialorder %v166, 0.0
    %v169 = vmul.f32 %v166, 0.01
    %v170 = vsel %vm168, %v166, %v169
    %v171 = vrot.slane %v170, 4
    %v172 = vadd.f32 %v170, %v171
    %v173 = vrot.slane %v172, 2
    %v174 = vadd.f32 %v172, %v173
    %v175 = vrot.slane %v174, 1
    %v176 = vadd.f32 %v174, %v175
    %v177 = vmul.f32 %v170, %v170
    %v178 = vrot.slane %v177, 4
    %v179 = vadd.f32 %v177, %v178
    %v180 = vrot.slane %v179, 2
    %v181 = vadd.f32 %v179, %v180
    %v182 = vrot.slane %v181, 1
    %v183 = vadd.f32 %v181, %v182
    %v184 = vmul.f32 %v176, 0.125
    %v185 = vmul.f32 %v183, 0.125
    %v186 = vmul.f32 %v184, %v184
    %v187 = vsub.f32 %v185, %v186
    %v188 = vmax.f32 %v187, 0.0
    %v189 = vadd.f32 %v188, 1e-05
    %v190 = vrsqrt.pop %v189
    %v191 = vmul.f32 %v190, %v189
    %v192 = vmul.f32 %v191, %v190
    %v193 = vmul.f32 0.5, %v192
    %v194 = vsub.f32 1.5, %v193
    %v195 = vmul.f32 %v190, %v194
    %vm196 = vweird.f32 %v189
    %vm197 = vweird.f32 %v190
    %vm198 = vmor %vm196, %vm197
    %v199 = vsel %vm198, %v190, %v195
    %v200 = vld [vmem:[%s3] sm:$0x1]
    %v201 = vmul.f32 %v200, %v199
    %v202 = vld [vmem:[%s4] sm:$0x1]
    %v203 = vmul.f32 %v184, %v201
    %v204 = vsub.f32 %v202, %v203
    %v206 = vperm.slane %v201, 0
    %v208 = vmul.f32 %v170, %v206
    %v210 = vperm.slane %v204, 0
    %v212 = vadd.f32 %v208, %v210
    %v213 = vld [vmem:[#allocation7] sm:$0xff]
    %v214 = vld [vmem:[#allocation7 + $0x8] sm:$0xff]
    %v215 = vld [vmem:[#allocation7 + $0x10] sm:$0xff]
    %v216 = vld [vmem:[#allocation7 + $0x18] sm:$0xff]
    %v217 = vld [vmem:[#allocation7 + $0x20] sm:$0xff]
    %v218 = vld [vmem:[#allocation7 + $0x28] sm:$0xff]
    %v219 = vld [vmem:[#allocation7 + $0x30] sm:$0xff]
    %v220 = vld [vmem:[#allocation7 + $0x38] sm:$0xff]
    %v221 = vld [vmem:[#allocation7 + $0x40] sm:$0xff]
    %v222 = vld [vmem:[#allocation7 + $0x48] sm:$0xff]
    %v223 = vld [vmem:[#allocation7 + $0x50] sm:$0xff]
    %v224 = vld [vmem:[#allocation7 + $0x58] sm:$0xff]
    %v225 = vld [vmem:[#allocation7 + $0x60] sm:$0xff]
    %v226 = vld [vmem:[#allocation7 + $0x68] sm:$0xff]
    %v227 = vld [vmem:[#allocation7 + $0x70] sm:$0xff]
    %v228 = vld [vmem:[#allocation7 + $0x78] sm:$0xff]
    %v229 = vld [vmem:[%s6] sm:$0x1]
    %v231 = vperm.slane %v229, 0
    %233 = vmatpush.msra.mxu0 %v228
    %234 = vmatpush.msra.mxu0 %v227
    %235 = vmatpush.msra.mxu0 %v226
    %236 = vmatpush.msra.mxu0 %v225
    %237 = vmatpush.msra.mxu0 %v224
    %238 = vmatpush.msra.mxu0 %v223
    %239 = vmatpush.msra.mxu0 %v222
    %240 = vmatpush.msra.mxu0 %v221
    %241 = vmatpush.msra.mxu0 %v220
    %242 = vmatpush.msra.mxu0 %v219
    %243 = vmatpush.msra.mxu0 %v218
    %244 = vmatpush.msra.mxu0 %v217
    %245 = vmatpush.msra.mxu0 %v216
    %246 = vmatpush.msra.mxu0 %v215
    %247 = vmatpush.msra.mxu0 %v214
    %248 = vmatpush.msra.mxu0 %v213
    %249 = vmatmul.f32.gmra.mxu0 %v212
    %v250 = vpop.f32.mrf.mxu0
    %v251 = vadd.f32 %v231, %v250
    %252 = vdwg.mxu0
    %vm253 = vcmp.gt.f32.partialorder %v251, 0.0
    %v254 = vmul.f32 %v251, 0.01
    %v255 = vsel %vm253, %v251, %v254
    %v256 = vrot.slane %v255, 4
    %v257 = vadd.f32 %v255, %v256
    %v258 = vrot.slane %v257, 2
    %v259 = vadd.f32 %v257, %v258
    %v260 = vrot.slane %v259, 1
    %v261 = vadd.f32 %v259, %v260
    %v262 = vmul.f32 %v255, %v255
    %v263 = vrot.slane %v262, 4
    %v264 = vadd.f32 %v262, %v263
    %v265 = vrot.slane %v264, 2
    %v266 = vadd.f32 %v264, %v265
    %v267 = vrot.slane %v266, 1
    %v268 = vadd.f32 %v266, %v267
    %v269 = vmul.f32 %v261, 0.125
    %v270 = vmul.f32 %v268, 0.125
    %v271 = vmul.f32 %v269, %v269
    %v272 = vsub.f32 %v270, %v271
    %v273 = vmax.f32 %v272, 0.0
    %v274 = vadd.f32 %v273, 1e-05
    %v275 = vrsqrt.pop %v274
    %v276 = vmul.f32 %v275, %v274
    %v277 = vmul.f32 %v276, %v275
    %v278 = vmul.f32 0.5, %v277
    %v279 = vsub.f32 1.5, %v278
    %v280 = vmul.f32 %v275, %v279
    %vm281 = vweird.f32 %v274
    %vm282 = vweird.f32 %v275
    %vm283 = vmor %vm281, %vm282
    %v284 = vsel %vm283, %v275, %v280
    %v285 = vld [vmem:[%s7] sm:$0x1]
    %v286 = vmul.f32 %v285, %v284
    %v287 = vld [vmem:[%s8] sm:$0x1]
    %v288 = vmul.f32 %v269, %v286
    %v289 = vsub.f32 %v287, %v288
    %v291 = vperm.slane %v286, 0
    %v293 = vmul.f32 %v255, %v291
    %v295 = vperm.slane %v289, 0
    %v297 = vadd.f32 %v293, %v295
    %v298 = vld [vmem:[#allocation8] sm:$0xff]
    %v299 = vld [vmem:[#allocation8 + $0x8] sm:$0xff]
    %v300 = vld [vmem:[#allocation8 + $0x10] sm:$0xff]
    %v301 = vld [vmem:[#allocation8 + $0x18] sm:$0xff]
    %v302 = vld [vmem:[#allocation8 + $0x20] sm:$0xff]
    %v303 = vld [vmem:[#allocation8 + $0x28] sm:$0xff]
    %v304 = vld [vmem:[#allocation8 + $0x30] sm:$0xff]
    %v305 = vld [vmem:[#allocation8 + $0x38] sm:$0xff]
    %v306 = vld [vmem:[#allocation8 + $0x40] sm:$0xff]
    %v307 = vld [vmem:[#allocation8 + $0x48] sm:$0xff]
    %v308 = vld [vmem:[#allocation8 + $0x50] sm:$0xff]
    %v309 = vld [vmem:[#allocation8 + $0x58] sm:$0xff]
    %v310 = vld [vmem:[#allocation8 + $0x60] sm:$0xff]
    %v311 = vld [vmem:[#allocation8 + $0x68] sm:$0xff]
    %v312 = vld [vmem:[#allocation8 + $0x70] sm:$0xff]
    %v313 = vld [vmem:[#allocation8 + $0x78] sm:$0xff]
    %v314 = vld [vmem:[%s10] sm:$0x1]
    %v316 = vperm.slane %v314, 0
    %318 = vmatpush.msra.mxu0 %v313
    %319 = vmatpush.msra.mxu0 %v312
    %320 = vmatpush.msra.mxu0 %v311
    %321 = vmatpush.msra.mxu0 %v310
    %322 = vmatpush.msra.mxu0 %v309
    %323 = vmatpush.msra.mxu0 %v308
    %324 = vmatpush.msra.mxu0 %v307
    %325 = vmatpush.msra.mxu0 %v306
    %326 = vmatpush.msra.mxu0 %v305
    %327 = vmatpush.msra.mxu0 %v304
    %328 = vmatpush.msra.mxu0 %v303
    %329 = vmatpush.msra.mxu0 %v302
    %330 = vmatpush.msra.mxu0 %v301
    %331 = vmatpush.msra.mxu0 %v300
    %332 = vmatpush.msra.mxu0 %v299
    %333 = vmatpush.msra.mxu0 %v298
    %334 = vmatmul.f32.gmra.mxu0 %v297
    %v335 = vpop.f32.mrf.mxu0
    %v336 = vadd.f32 %v316, %v335
    %337 = vdwg.mxu0
    %vm338 = vcmp.gt.f32.partialorder %v336, 0.0
    %v339 = vmul.f32 %v336, 0.01
    %v340 = vsel %vm338, %v336, %v339
    %v341 = vrot.slane %v340, 4
    %v342 = vadd.f32 %v340, %v341
    %v343 = vrot.slane %v342, 2
    %v344 = vadd.f32 %v342, %v343
    %v345 = vrot.slane %v344, 1
    %v346 = vadd.f32 %v344, %v345
    %v347 = vmul.f32 %v340, %v340
    %v348 = vrot.slane %v347, 4
    %v349 = vadd.f32 %v347, %v348
    %v350 = vrot.slane %v349, 2
    %v351 = vadd.f32 %v349, %v350
    %v352 = vrot.slane %v351, 1
    %v353 = vadd.f32 %v351, %v352
    %v354 = vmul.f32 %v346, 0.125
    %v355 = vmul.f32 %v353, 0.125
    %v356 = vmul.f32 %v354, %v354
    %v357 = vsub.f32 %v355, %v356
    %v358 = vmax.f32 %v357, 0.0
    %v359 = vadd.f32 %v358, 1e-05
    %v360 = vrsqrt.pop %v359
    %v361 = vmul.f32 %v360, %v359
    %v362 = vmul.f32 %v361, %v360
    %v363 = vmul.f32 0.5, %v362
    %v364 = vsub.f32 1.5, %v363
    %v365 = vmul.f32 %v360, %v364
    %vm366 = vweird.f32 %v359
    %vm367 = vweird.f32 %v360
    %vm368 = vmor %vm366, %vm367
    %v369 = vsel %vm368, %v360, %v365
    %v370 = vld [vmem:[%s11] sm:$0x1]
    %v371 = vmul.f32 %v370, %v369
    %v372 = vld [vmem:[%s12] sm:$0x1]
    %v373 = vmul.f32 %v354, %v371
    %v374 = vsub.f32 %v372, %v373
    %v376 = vperm.slane %v371, 0
    %v378 = vmul.f32 %v340, %v376
    %v380 = vperm.slane %v374, 0
    %v382 = vadd.f32 %v378, %v380
    %v383 = vld [vmem:[#allocation10] sm:$0xff]
    %v384 = vld [vmem:[#allocation10 + $0x8] sm:$0xff]
    %v385 = vld [vmem:[#allocation10 + $0x10] sm:$0xff]
    %v386 = vld [vmem:[#allocation10 + $0x18] sm:$0xff]
    %v387 = vld [vmem:[#allocation10 + $0x20] sm:$0xff]
    %v388 = vld [vmem:[#allocation10 + $0x28] sm:$0xff]
    %v389 = vld [vmem:[#allocation10 + $0x30] sm:$0xff]
    %v390 = vld [vmem:[#allocation10 + $0x38] sm:$0xff]
    %v391 = vld [vmem:[#allocation10 + $0x40] sm:$0xff]
    %v392 = vld [vmem:[#allocation10 + $0x48] sm:$0xff]
    %v393 = vld [vmem:[#allocation10 + $0x50] sm:$0xff]
    %v394 = vld [vmem:[#allocation10 + $0x58] sm:$0xff]
    %v395 = vld [vmem:[#allocation10 + $0x60] sm:$0xff]
    %v396 = vld [vmem:[#allocation10 + $0x68] sm:$0xff]
    %v397 = vld [vmem:[#allocation10 + $0x70] sm:$0xff]
    %v398 = vld [vmem:[#allocation10 + $0x78] sm:$0xff]
    %v399 = vld [vmem:[%s14] sm:$0x1]
    %v401 = vperm.slane %v399, 0
    %403 = vmatpush.msra.mxu0 %v398
    %404 = vmatpush.msra.mxu0 %v397
    %405 = vmatpush.msra.mxu0 %v396
    %406 = vmatpush.msra.mxu0 %v395
    %407 = vmatpush.msra.mxu0 %v394
    %408 = vmatpush.msra.mxu0 %v393
    %409 = vmatpush.msra.mxu0 %v392
    %410 = vmatpush.msra.mxu0 %v391
    %411 = vmatpush.msra.mxu0 %v390
    %412 = vmatpush.msra.mxu0 %v389
    %413 = vmatpush.msra.mxu0 %v388
    %414 = vmatpush.msra.mxu0 %v387
    %415 = vmatpush.msra.mxu0 %v386
    %416 = vmatpush.msra.mxu0 %v385
    %417 = vmatpush.msra.mxu0 %v384
    %418 = vmatpush.msra.mxu0 %v383
    %419 = vmatmul.f32.gmra.mxu0 %v382
    %v420 = vpop.f32.mrf.mxu0
    %v421 = vadd.f32 %v401, %v420
    %422 = vdwg.mxu0
    %v423 = vlaneseq
    %v424 = vand.u32 %v423, 127
    %vm425 = vcmp.lt.s32.totalorder %v424, 10
    %v426 = vsel %vm425, %v421, -1e+30
    %427 = vmax.xlane.f32.xlu0 %v426
    %v428 = vpop.xlane.xlu0 %427
    %v429 = vsub.f32 %v426, %v428
    %v430 = vmul.f32 %v429, 1.442695
    %v431 = vpow.pop %v430
    %v432 = vsel %vm425, %v431, 0.0
    %433 = vadd.xlane.f32.xlu0 %v432
    %v434 = vpop.xlane.xlu0 %433
    %v435 = vlog2.pop %v434
    %v436 = vmul.f32 %v435, 0.6931472
    %v437 = vsub.f32 %v429, %v436
    %438 = vst [vmem:[#allocation11] sm:$0xff] %v437
    // Predicated region
    $region82: #{forward.1} parent=1 // pred_check
      _
    $region83: #{forward.1} parent=1 // pred_check_branch
      %440 = sbr.rel (0) target = $region85
    $region84: #{forward.1} parent=1 // pred_region
      %442 = vsyncadd [#allocation4], 0
      %s444 = sshll.u32 [#allocation11], 4
      %s445 = int_to_ptr.vmem [resolvable:$true] %s444
      %s446 = sshll.u32 %s15, 4
      %s447 = int_to_ptr.hbm [resolvable:$true] %s446
      %449 = dma.vmem_to_hbm [thread:$0]  %s445, 128, %s447, [#allocation4]
    $region85: #{forward.1} parent=1 // pred_fallthru
      _
    // Predicated region
    $region86: #{forward.1} parent=1 // pred_check
      _
    $region87: #{forward.1} parent=1 // pred_check_branch
      %451 = sbr.rel (0) target = $region89
    $region88: #{forward.1} parent=1 // pred_region
      %453 = dma.done [#allocation4], 128
    $region89: #{forward.1} parent=1 // pred_fallthru
      _
    %454 = vsyncpa [#allocation3], 1
    %455 = vsyncpa [#allocation6], 1
    %456 = vsyncpa [#allocation9], 1
    %457 = vsyncpa [#allocation4], 1

</llo_original>
